<compile_context>
chip_gen: v7x
topology: tpu7x:2x2x1
jax: 0.10.0
libtpu: 0.0.40
codegen_flags: <defaults>
</compile_context>

<pallas_src>
import functools
import math

import jax
import jax.numpy as jnp
from jax.experimental import pallas as pl
from jax.experimental.pallas import tpu as pltpu

# Finite "minus infinity" for masked_fill: keeps the online softmax NaN-free
# while underflowing to exactly 0 probability for masked keys whenever a row
# has at least one unmasked key (matches torch -inf + softmax there).
_MASK_VALUE = -1e30


# --------------------------------------------------------------------------
# Kernel bodies
# --------------------------------------------------------------------------
def _init(m_sc, l_sc, acc_sc):
    m_sc[...] = jnp.full_like(m_sc, _MASK_VALUE)
    l_sc[...] = jnp.zeros_like(l_sc)
    acc_sc[...] = jnp.zeros_like(acc_sc)


def _softmax_update(q_ref, k_ref, v_ref, mask, m_sc, l_sc, acc_sc,
                    *, inv_temp, bf16_exp):
    # Fold 1/temperature into the (bt, tq, D) q tile once per step: far fewer
    # VPU multiplies than scaling the (bt, tq, tk) score tile every kv step.
    qv = q_ref[...] * jnp.asarray(inv_temp, dtype=q_ref.dtype)

    # scores = q @ k^T, contraction over D (no K transpose materialized),
    # operands in native dtype, f32 accumulation on the MXU.
    s = jnp.einsum("bqd,bkd->bqk", qv, k_ref[...],
                   preferred_element_type=jnp.float32)
    if mask is not None:
        s = jnp.where(mask, _MASK_VALUE, s)

    m_prev = m_sc[...]
    m_new = jnp.maximum(m_prev, jnp.max(s, axis=-1, keepdims=True))
    alpha = jnp.exp(m_prev - m_new)                       # (bt, tq, 1) f32
    if bf16_exp:
        # bf16 EUP exp (v6e/v7x): ~2x on the saturating exp slot for D~64.
        p = jnp.exp((s - m_new).astype(jnp.bfloat16))
        l_sc[...] = alpha * l_sc[...] + jnp.sum(
            p.astype(jnp.float32), axis=-1, keepdims=True)
    else:
        p = jnp.exp(s - m_new)
        l_sc[...] = alpha * l_sc[...] + jnp.sum(p, axis=-1, keepdims=True)
    acc_sc[...] = alpha * acc_sc[...] + jnp.einsum(
        "bqk,bkd->bqd", p.astype(v_ref.dtype), v_ref[...],
        preferred_element_type=jnp.float32)
    m_sc[...] = m_new


def _finalize(o_ref, m_sc, l_sc, acc_sc):
    # TODO(synk): nn.Dropout(0.1) on attention probabilities is an eval-mode
    # identity here; training would use pltpu.prng_seed + stateful_bernoulli.
    approx = jnp.dtype(o_ref.dtype) != jnp.dtype(jnp.float32)
    inv_l = pl.reciprocal(l_sc[...], approx=approx)        # EUP vrcp when ok
    o_ref[...] = (acc_sc[...] * inv_l).astype(o_ref.dtype)


def _kernel_nomask(q_ref, k_ref, v_ref, o_ref, m_sc, l_sc, acc_sc,
                   *, inv_temp, bf16_exp):
    ki = pl.program_id(2)

    @pl.when(ki == 0)
    def _():
        _init(m_sc, l_sc, acc_sc)

    _softmax_update(q_ref, k_ref, v_ref, None, m_sc, l_sc, acc_sc,
                    inv_temp=inv_temp, bf16_exp=bf16_exp)

    @pl.when(ki == pl.num_programs(2) - 1)
    def _():
        _finalize(o_ref, m_sc, l_sc, acc_sc)


def _kernel_dense_mask(q_ref, k_ref, v_ref, mask_ref, o_ref,
                       m_sc, l_sc, acc_sc, *, inv_temp, bf16_exp):
    ki = pl.program_id(2)

    @pl.when(ki == 0)
    def _():
        _init(m_sc, l_sc, acc_sc)

    _softmax_update(q_ref, k_ref, v_ref, mask_ref[...], m_sc, l_sc, acc_sc,
                    inv_temp=inv_temp, bf16_exp=bf16_exp)

    @pl.when(ki == pl.num_programs(2) - 1)
    def _():
        _finalize(o_ref, m_sc, l_sc, acc_sc)


def _kernel_keymask(skip_ref, q_ref, k_ref, v_ref, km_ref, o_ref,
                    m_sc, l_sc, acc_sc, *, inv_temp, bf16_exp, n_kv):
    b = pl.program_id(0)
    ki = pl.program_id(2)

    @pl.when(ki == 0)
    def _():
        _init(m_sc, l_sc, acc_sc)

    # Skip fully-padded kv tiles entirely (no MXU matmuls, no exp).
    @pl.when(skip_ref[b * n_kv + ki] == 0)
    def _():
        # km_ref is (bt, 1, tk); broadcasts over the tq axis of the scores.
        _softmax_update(q_ref, k_ref, v_ref, km_ref[...], m_sc, l_sc, acc_sc,
                        inv_temp=inv_temp, bf16_exp=bf16_exp)

    @pl.when(ki == pl.num_programs(2) - 1)
    def _():
        _finalize(o_ref, m_sc, l_sc, acc_sc)


# --------------------------------------------------------------------------
# Tiling helpers
# --------------------------------------------------------------------------
def _pick_tile(n, target, quanta):
    """Largest tile <= target that divides n, preferring larger quanta."""
    if n <= target:
        return n
    for q in quanta:
        t = (target // q) * q
        while t >= q:
            if n % t == 0:
                return t
            t -= q
    return n   # awkward n: fall back to the full axis (always legal)


def _pick_batch_tile(b, lq, lk, n_q_tiles):
    """Fuse batch elements for tiny per-head problems to amortize the
    ~0.35us per-grid-step overhead, but keep >= 2 'parallel' grid steps so
    both v7x TensorCores have work."""
    if lq > 128 or lk > 128:
        return 1
    for require_two_steps in (True, False):
        for bt in (64, 32, 16, 8, 4, 2):
            if bt <= b and b % bt == 0:
                if require_two_steps and (b // bt) * n_q_tiles < 2:
                    continue
                return bt
    return 1


def _nbytes(shape, dtype):
    n = 1
    for s in shape:
        n *= int(s)
    return n * jnp.dtype(dtype).itemsize


def _vmem_limit_bytes(in_block_bytes, out_block_bytes, scratch_bytes):
    # 2x double-buffering on pipelined operands + headroom; clamp to 48 MiB
    # which is safe on every generation (v7x physical VMEM is 64 MiB).
    need = 2 * (in_block_bytes + out_block_bytes) + scratch_bytes + (8 << 20)
    return int(min(48 << 20, max(32 << 20, need)))


# --------------------------------------------------------------------------
# Public wrapper
# --------------------------------------------------------------------------
def scaled_dot_product_attention(q, k, v, mask=None, *, temperature=1.0):
    """q: [B, Lq, D], k: [B, Lk, D], v: [B, Lk, Dv].
    mask: None, [B, Lk] key-padding bool, or [B, Lq, Lk] dense bool
    (True = masked, as in torch masked_fill)."""
    B, Lq, D = q.shape
    _, Lk, Dv = v.shape
    inv_temp = 1.0 / float(temperature)
    bf16_exp = (q.dtype == jnp.bfloat16 and v.dtype == jnp.bfloat16)

    dense_mask = mask is not None and mask.ndim == 3
    key_mask = mask is not None and mask.ndim == 2
    if mask is not None and not (dense_mask or key_mask):
        raise ValueError(f"mask must be [B, Lk] or [B, Lq, Lk], got {mask.shape}")
    if mask is not None and mask.dtype != jnp.bool_:
        mask = mask != 0        # feed bool directly; no int8 HBM round trip

    # Tile sizes: tk is the lane dim of the score tile -> multiple of 128;
    # tq multiple of 16 (32 when a dense bool mask rides along, for packing).
    tq_quanta = (32, 16, 8) if dense_mask else (16, 8)
    tq = _pick_tile(Lq, 256, tq_quanta)
    tk = _pick_tile(Lk, 512, (128,))
    bt = _pick_batch_tile(B, Lq, Lk, Lq // tq)

    grid = (B // bt, Lq // tq, Lk // tk)
    n_kv = grid[2]

    scratch = [
        pltpu.VMEM((bt, tq, 1), jnp.float32),    # running max m
        pltpu.VMEM((bt, tq, 1), jnp.float32),    # running denominator l
        pltpu.VMEM((bt, tq, Dv), jnp.float32),   # running numerator acc
    ]
    scratch_bytes = (2 * _nbytes((bt, tq, 1), jnp.float32)
                     + _nbytes((bt, tq, Dv), jnp.float32))
    out_shape = jax.ShapeDtypeStruct((B, Lq, Dv), q.dtype)
    out_block_bytes = _nbytes((bt, tq, Dv), q.dtype)

    qkv_block_bytes = (_nbytes((bt, tq, D), q.dtype)
                       + _nbytes((bt, tk, D), k.dtype)
                       + _nbytes((bt, tk, Dv), v.dtype))

    def _params(extra_in_bytes=0):
        return pltpu.CompilerParams(
            dimension_semantics=("parallel", "parallel", "arbitrary"),
            vmem_limit_bytes=_vmem_limit_bytes(
                qkv_block_bytes + extra_in_bytes, out_block_bytes,
                scratch_bytes))

    if mask is None:
        # Specialized no-mask path: nothing mask-related is DMA'd at all.
        q_spec = pl.BlockSpec((bt, tq, D), lambda b, qi, ki: (b, qi, 0))
        k_spec = pl.BlockSpec((bt, tk, D), lambda b, qi, ki: (b, ki, 0))
        v_spec = pl.BlockSpec((bt, tk, Dv), lambda b, qi, ki: (b, ki, 0))
        o_spec = pl.BlockSpec((bt, tq, Dv), lambda b, qi, ki: (b, qi, 0))
        kernel = functools.partial(_kernel_nomask, inv_temp=inv_temp,
                                   bf16_exp=bf16_exp)
        return pl.pallas_call(
            kernel,
            out_shape=out_shape,
            grid_spec=pltpu.PrefetchScalarGridSpec(
                num_scalar_prefetch=0, grid=grid,
                in_specs=[q_spec, k_spec, v_spec],
                out_specs=o_spec, scratch_shapes=scratch),
            compiler_params=_params(),
        )(q, k, v)

    if key_mask:
        # Compact [B, Lk] key-padding mask: B*Lk bytes of HBM traffic instead
        # of B*Lq*Lk; broadcast over the tq axis inside the kernel.
        km = mask.reshape(B, 1, Lk)
        # Per-(batch-group, kv-tile) skip table (scalar-prefetched into SMEM):
        # skip iff every key of the tile is padded for every fused batch elem.
        skip = jnp.all(mask.reshape(B // bt, bt, n_kv, tk), axis=(1, 3))
        skip = skip.reshape(-1).astype(jnp.int32)          # 1-D: cheap in SMEM

        q_spec = pl.BlockSpec((bt, tq, D), lambda b, qi, ki, s: (b, qi, 0))
        k_spec = pl.BlockSpec((bt, tk, D), lambda b, qi, ki, s: (b, ki, 0))
        v_spec = pl.BlockSpec((bt, tk, Dv), lambda b, qi, ki, s: (b, ki, 0))
        km_spec = pl.BlockSpec((bt, 1, tk), lambda b, qi, ki, s: (b, 0, ki))
        o_spec = pl.BlockSpec((bt, tq, Dv), lambda b, qi, ki, s: (b, qi, 0))
        kernel = functools.partial(_kernel_keymask, inv_temp=inv_temp,
                                   bf16_exp=bf16_exp, n_kv=n_kv)
        return pl.pallas_call(
            kernel,
            out_shape=out_shape,
            grid_spec=pltpu.PrefetchScalarGridSpec(
                num_scalar_prefetch=1, grid=grid,
                in_specs=[q_spec, k_spec, v_spec, km_spec],
                out_specs=o_spec, scratch_shapes=scratch),
            compiler_params=_params(_nbytes((bt, 1, tk), jnp.bool_)),
        )(skip, q, k, v, km)

    # Dense [B, Lq, Lk] mask (full generality of the torch module).
    q_spec = pl.BlockSpec((bt, tq, D), lambda b, qi, ki: (b, qi, 0))
    k_spec = pl.BlockSpec((bt, tk, D), lambda b, qi, ki: (b, ki, 0))
    v_spec = pl.BlockSpec((bt, tk, Dv), lambda b, qi, ki: (b, ki, 0))
    m_spec = pl.BlockSpec((bt, tq, tk), lambda b, qi, ki: (b, qi, ki))
    o_spec = pl.BlockSpec((bt, tq, Dv), lambda b, qi, ki: (b, qi, 0))
    kernel = functools.partial(_kernel_dense_mask, inv_temp=inv_temp,
                               bf16_exp=bf16_exp)
    return pl.pallas_call(
        kernel,
        out_shape=out_shape,
        grid_spec=pltpu.PrefetchScalarGridSpec(
            num_scalar_prefetch=0, grid=grid,
            in_specs=[q_spec, k_spec, v_spec, m_spec],
            out_specs=o_spec, scratch_shapes=scratch),
        compiler_params=_params(_nbytes((bt, tq, tk), jnp.bool_)),
    )(q, k, v, mask)


# --------------------------------------------------------------------------
# Pure-JAX reference (torch semantics) and self-test
# --------------------------------------------------------------------------
def _reference(q, k, v, mask, temperature):
    attn = jnp.einsum("bqd,bkd->bqk", q.astype(jnp.float32),
                      k.astype(jnp.float32)) / temperature
    if mask is not None:
        attn = jnp.where(mask, -jnp.inf, attn)
    attn = jax.nn.softmax(attn, axis=2)
    return jnp.einsum("bqk,bkd->bqd", attn, v.astype(jnp.float32))


if __name__ == "__main__":
    keys = jax.random.split(jax.random.PRNGKey(0), 6)

    # --- 1) FastSpeech per-head shape, f32, dense [B, Lq, Lk] mask ---------
    B, Lq, Lk, D = 2, 8, 8, 32
    temperature = float(D) ** 0.5
    q = jax.random.normal(keys[0], (B, Lq, D), dtype=jnp.float32)
    k = jax.random.normal(keys[1], (B, Lk, D), dtype=jnp.float32)
    v = jax.random.normal(keys[2], (B, Lk, D), dtype=jnp.float32)

    dense_mask = jnp.zeros((B, Lq, Lk), dtype=bool).at[1, :, Lk - 2:].set(True)
    out = jax.block_until_ready(
        scaled_dot_product_attention(q, k, v, dense_mask,
                                     temperature=temperature))
    ref = _reference(q, k, v, dense_mask, temperature)
    assert out.shape == (B, Lq, D)
    assert jnp.allclose(out, ref, atol=2e-3, rtol=2e-3), "dense-mask mismatch"

    # --- 2) Same shapes, compact [B, Lk] key-padding mask path -------------
    key_mask = jnp.zeros((B, Lk), dtype=bool).at[1, Lk - 2:].set(True)
    out2 = jax.block_until_ready(
        scaled_dot_product_attention(q, k, v, key_mask,
                                     temperature=temperature))
    ref2 = _reference(q, k, v, key_mask[:, None, :], temperature)
    assert jnp.allclose(out2, ref2, atol=2e-3, rtol=2e-3), "key-mask mismatch"

    # --- 3) Specialized no-mask path ----------------------------------------
    out3 = jax.block_until_ready(
        scaled_dot_product_attention(q, k, v, None, temperature=temperature))
    ref3 = _reference(q, k, v, None, temperature)
    assert jnp.allclose(out3, ref3, atol=2e-3, rtol=2e-3), "no-mask mismatch"

    # --- 4) bf16, multi-kv-tile flash path with padded-tile skipping -------
    B2, Lq2, Lk2, D2 = 2, 512, 1024, 64
    temp2 = float(D2) ** 0.5
    q2 = jax.random.normal(keys[3], (B2, Lq2, D2), dtype=jnp.bfloat16)
    k2 = jax.random.normal(keys[4], (B2, Lk2, D2), dtype=jnp.bfloat16)
    v2 = jax.random.normal(keys[5], (B2, Lk2, D2), dtype=jnp.bfloat16)
    lens = jnp.array([200, 900], dtype=jnp.int32)        # batch 0: tile 1 skipped
    key_mask2 = jnp.arange(Lk2, dtype=jnp.int32)[None, :] >= lens[:, None]

    out4 = jax.block_until_ready(
        scaled_dot_product_attention(q2, k2, v2, key_mask2, temperature=temp2))
    ref4 = _reference(q2, k2, v2, key_mask2[:, None, :], temp2)
    assert out4.shape == (B2, Lq2, D2)
    assert jnp.allclose(out4.astype(jnp.float32), ref4, atol=5e-2, rtol=5e-2), \
        "bf16 flash-tiled / tile-skip path mismatch"

    print("KERNEL_OK")
</pallas_src>

<mosaic_0001>
module attributes {stable_mosaic.version = 11 : i64} {
  func.func @_kernel_dense_mask(%arg0: i32, %arg1: i32, %arg2: i32, %arg3: memref<2x8x32xf32, #tpu.memory_space<vmem>>, %arg4: memref<2x8x32xf32, #tpu.memory_space<vmem>>, %arg5: memref<2x8x32xf32, #tpu.memory_space<vmem>>, %arg6: memref<2x8x8xi32, #tpu.memory_space<vmem>>, %arg7: memref<2x8x32xf32, #tpu.memory_space<vmem>>, %arg8: memref<2x8x1xf32, #tpu.memory_space<vmem>>, %arg9: memref<2x8x1xf32, #tpu.memory_space<vmem>>, %arg10: memref<2x8x32xf32, #tpu.memory_space<vmem>>) attributes {dimension_semantics = [#tpu.dimension_semantics<parallel>, #tpu.dimension_semantics<parallel>, #tpu.dimension_semantics<arbitrary>], iteration_bounds = array<i64: 1, 1, 1>, scalar_prefetch = 0 : i64, scratch_operands = 3 : i64, tpu.core_type = #tpu.core_type<tc>, window_params = [{transform_indices = @transform_0, window_bounds = array<i64: 2, 8, 32>}, {transform_indices = @transform_1, window_bounds = array<i64: 2, 8, 32>}, {transform_indices = @transform_2, window_bounds = array<i64: 2, 8, 32>}, {transform_indices = @transform_3, window_bounds = array<i64: 2, 8, 8>}, {transform_indices = @transform_4, window_bounds = array<i64: 2, 8, 32>}]} {
    %c0_i32 = arith.constant 0 : i32
    %0 = arith.cmpi eq, %arg2, %c0_i32 : i32
    %1 = arith.extui %0 : i1 to i32
    %c0_i32_0 = arith.constant 0 : i32
    %2 = arith.cmpi ne, %1, %c0_i32_0 : i32
    scf.if %2 {
      %cst_38 = arith.constant -1.000000e+30 : f32
      %38 = vector.broadcast %cst_38 : f32 to vector<2x8x1xf32>
      %c0_39 = arith.constant 0 : index
      %c0_40 = arith.constant 0 : index
      %c0_41 = arith.constant 0 : index
      %39 = vector.load %arg8[%c0_39, %c0_40, %c0_41] : memref<2x8x1xf32, #tpu.memory_space<vmem>>, vector<2x8x1xf32>
      tpu.vector_store %arg8[%c0_39, %c0_40, %c0_41], %38 {strides = array<i32>} : memref<2x8x1xf32, #tpu.memory_space<vmem>>, vector<2x8x1xf32>,
      %cst_42 = arith.constant 0.000000e+00 : f32
      %40 = vector.broadcast %cst_42 : f32 to vector<2x8x1xf32>
      %c0_43 = arith.constant 0 : index
      %c0_44 = arith.constant 0 : index
      %c0_45 = arith.constant 0 : index
      %41 = vector.load %arg9[%c0_43, %c0_44, %c0_45] : memref<2x8x1xf32, #tpu.memory_space<vmem>>, vector<2x8x1xf32>
      tpu.vector_store %arg9[%c0_43, %c0_44, %c0_45], %40 {strides = array<i32>} : memref<2x8x1xf32, #tpu.memory_space<vmem>>, vector<2x8x1xf32>,
      %cst_46 = arith.constant 0.000000e+00 : f32
      %42 = vector.broadcast %cst_46 : f32 to vector<2x8x32xf32>
      %c0_47 = arith.constant 0 : index
      %c0_48 = arith.constant 0 : index
      %c0_49 = arith.constant 0 : index
      %43 = vector.load %arg10[%c0_47, %c0_48, %c0_49] : memref<2x8x32xf32, #tpu.memory_space<vmem>>, vector<2x8x32xf32>
      tpu.vector_store %arg10[%c0_47, %c0_48, %c0_49], %42 {strides = array<i32>} : memref<2x8x32xf32, #tpu.memory_space<vmem>>, vector<2x8x32xf32>,
    } else {
    }
    %c0 = arith.constant 0 : index
    %c0_1 = arith.constant 0 : index
    %c0_2 = arith.constant 0 : index
    %3 = vector.load %arg6[%c0, %c0_1, %c0_2] : memref<2x8x8xi32, #tpu.memory_space<vmem>>, vector<2x8x8xi32>
    %cst = arith.constant dense<0> : vector<2x8x8xi32>
    %4 = arith.cmpi ne, %3, %cst : vector<2x8x8xi32>
    %c0_3 = arith.constant 0 : index
    %c0_4 = arith.constant 0 : index
    %c0_5 = arith.constant 0 : index
    %5 = vector.load %arg3[%c0_3, %c0_4, %c0_5] : memref<2x8x32xf32, #tpu.memory_space<vmem>>, vector<2x8x32xf32>
    %cst_6 = arith.constant 0.176776692 : f32
    %6 = vector.broadcast %cst_6 : f32 to vector<2x8x32xf32>
    %7 = arith.mulf %5, %6 : vector<2x8x32xf32>
    %c0_7 = arith.constant 0 : index
    %c0_8 = arith.constant 0 : index
    %c0_9 = arith.constant 0 : index
    %8 = vector.load %arg4[%c0_7, %c0_8, %c0_9] : memref<2x8x32xf32, #tpu.memory_space<vmem>>, vector<2x8x32xf32>
    "tpu.trace_start"() <{level = 10 : i32, message = "bqd,bkd->bqk"}> : () -> ()
    %cst_10 = arith.constant dense<0.000000e+00> : vector<2x8x8xf32>
    %9 = tpu.matmul %7, %8, %cst_10 {dimension_numbers = #tpu.dot_dimension_numbers<[2], [2], [1], [1], [0, 0, 0, 1, 1, 1], [0], [0]>} : vector<2x8x32xf32>, vector<2x8x32xf32>, vector<2x8x8xf32> -> vector<2x8x8xf32>
    %cst_11 = arith.constant -1.000000e+30 : f32
    "tpu.trace_stop"() : () -> ()
    %10 = vector.broadcast %cst_11 : f32 to vector<2x8x8xf32>
    %11 = arith.select %4, %10, %9 : vector<2x8x8xi1>, vector<2x8x8xf32>
    %c0_12 = arith.constant 0 : index
    %c0_13 = arith.constant 0 : index
    %c0_14 = arith.constant 0 : index
    %12 = vector.load %arg8[%c0_12, %c0_13, %c0_14] : memref<2x8x1xf32, #tpu.memory_space<vmem>>, vector<2x8x1xf32>
    %cst_15 = arith.constant dense<0xFF800000> : vector<2x8xf32>
    %13 = vector.multi_reduction <maximumf>, %11, %cst_15 [2] : vector<2x8x8xf32> to vector<2x8xf32>
    %14 = vector.shape_cast %13 : vector<2x8xf32> to vector<2x8x1xf32>
    %15 = arith.maximumf %12, %14 : vector<2x8x1xf32>
    %16 = arith.subf %12, %15 : vector<2x8x1xf32>
    %17 = math.exp %16 : vector<2x8x1xf32>
    %18 = vector.broadcast %15 : vector<2x8x1xf32> to vector<2x8x8xf32>
    %19 = arith.subf %11, %18 : vector<2x8x8xf32>
    %20 = math.exp %19 : vector<2x8x8xf32>
    %c0_16 = arith.constant 0 : index
    %c0_17 = arith.constant 0 : index
    %c0_18 = arith.constant 0 : index
    %21 = vector.load %arg9[%c0_16, %c0_17, %c0_18] : memref<2x8x1xf32, #tpu.memory_space<vmem>>, vector<2x8x1xf32>
    %22 = arith.mulf %17, %21 : vector<2x8x1xf32>
    %cst_19 = arith.constant dense<0.000000e+00> : vector<2x8xf32>
    %23 = vector.multi_reduction <add>, %20, %cst_19 [2] : vector<2x8x8xf32> to vector<2x8xf32>
    %24 = vector.shape_cast %23 : vector<2x8xf32> to vector<2x8x1xf32>
    %25 = arith.addf %22, %24 : vector<2x8x1xf32>
    %c0_20 = arith.constant 0 : index
    %c0_21 = arith.constant 0 : index
    %c0_22 = arith.constant 0 : index
    %26 = vector.load %arg9[%c0_20, %c0_21, %c0_22] : memref<2x8x1xf32, #tpu.memory_space<vmem>>, vector<2x8x1xf32>
    tpu.vector_store %arg9[%c0_20, %c0_21, %c0_22], %25 {strides = array<i32>} : memref<2x8x1xf32, #tpu.memory_space<vmem>>, vector<2x8x1xf32>,
    %c0_23 = arith.constant 0 : index
    %c0_24 = arith.constant 0 : index
    %c0_25 = arith.constant 0 : index
    %27 = vector.load %arg10[%c0_23, %c0_24, %c0_25] : memref<2x8x32xf32, #tpu.memory_space<vmem>>, vector<2x8x32xf32>
    %28 = vector.broadcast %17 : vector<2x8x1xf32> to vector<2x8x32xf32>
    %29 = arith.mulf %28, %27 : vector<2x8x32xf32>
    %c0_26 = arith.constant 0 : index
    %c0_27 = arith.constant 0 : index
    %c0_28 = arith.constant 0 : index
    %30 = vector.load %arg5[%c0_26, %c0_27, %c0_28] : memref<2x8x32xf32, #tpu.memory_space<vmem>>, vector<2x8x32xf32>
    "tpu.trace_start"() <{level = 10 : i32, message = "bqk,bkd->bqd"}> : () -> ()
    %cst_29 = arith.constant dense<0.000000e+00> : vector<2x8x32xf32>
    %31 = tpu.matmul %20, %30, %cst_29 {dimension_numbers = #tpu.dot_dimension_numbers<[2], [1], [1], [2], [0, 0, 0, 1, 1, 2], [0], [0]>} : vector<2x8x8xf32>, vector<2x8x32xf32>, vector<2x8x32xf32> -> vector<2x8x32xf32>
    "tpu.trace_stop"() : () -> ()
    %32 = arith.addf %29, %31 : vector<2x8x32xf32>
    %c0_30 = arith.constant 0 : index
    %c0_31 = arith.constant 0 : index
    %c0_32 = arith.constant 0 : index
    %33 = vector.load %arg10[%c0_30, %c0_31, %c0_32] : memref<2x8x32xf32, #tpu.memory_space<vmem>>, vector<2x8x32xf32>
    tpu.vector_store %arg10[%c0_30, %c0_31, %c0_32], %32 {strides = array<i32>} : memref<2x8x32xf32, #tpu.memory_space<vmem>>, vector<2x8x32xf32>,
    %c0_33 = arith.constant 0 : index
    %c0_34 = arith.constant 0 : index
    %c0_35 = arith.constant 0 : index
    %34 = vector.load %arg8[%c0_33, %c0_34, %c0_35] : memref<2x8x1xf32, #tpu.memory_space<vmem>>, vector<2x8x1xf32>
    tpu.vector_store %arg8[%c0_33, %c0_34, %c0_35], %15 {strides = array<i32>} : memref<2x8x1xf32, #tpu.memory_space<vmem>>, vector<2x8x1xf32>,
    %c0_i32_36 = arith.constant 0 : i32
    %35 = arith.cmpi eq, %arg2, %c0_i32_36 : i32
    %36 = arith.extui %35 : i1 to i32
    %c0_i32_37 = arith.constant 0 : i32
    %37 = arith.cmpi ne, %36, %c0_i32_37 : i32
    scf.if %37 {
      %c0_38 = arith.constant 0 : index
      %c0_39 = arith.constant 0 : index
      %c0_40 = arith.constant 0 : index
      %38 = vector.load %arg9[%c0_38, %c0_39, %c0_40] : memref<2x8x1xf32, #tpu.memory_space<vmem>>, vector<2x8x1xf32>
      %39 = tpu.reciprocal %38 : vector<2x8x1xf32> -> vector<2x8x1xf32>
      %c0_41 = arith.constant 0 : index
      %c0_42 = arith.constant 0 : index
      %c0_43 = arith.constant 0 : index
      %40 = vector.load %arg10[%c0_41, %c0_42, %c0_43] : memref<2x8x32xf32, #tpu.memory_space<vmem>>, vector<2x8x32xf32>
      %41 = vector.broadcast %39 : vector<2x8x1xf32> to vector<2x8x32xf32>
      %42 = arith.mulf %40, %41 : vector<2x8x32xf32>
      %c0_44 = arith.constant 0 : index
      %c0_45 = arith.constant 0 : index
      %c0_46 = arith.constant 0 : index
      %43 = vector.load %arg7[%c0_44, %c0_45, %c0_46] : memref<2x8x32xf32, #tpu.memory_space<vmem>>, vector<2x8x32xf32>
      tpu.vector_store %arg7[%c0_44, %c0_45, %c0_46], %42 {strides = array<i32>} : memref<2x8x32xf32, #tpu.memory_space<vmem>>, vector<2x8x32xf32>,
    } else {
    }
    return
  }
  func.func @transform_0(%arg0: i32, %arg1: i32, %arg2: i32) -> (i32, i32, i32) {
    %c0_i32 = arith.constant 0 : i32
    %c0_i32_0 = arith.constant 0 : i32
    return %arg0, %arg1, %c0_i32 : i32, i32, i32
  }
  func.func @transform_1(%arg0: i32, %arg1: i32, %arg2: i32) -> (i32, i32, i32) {
    %c0_i32 = arith.constant 0 : i32
    %c0_i32_0 = arith.constant 0 : i32
    return %arg0, %arg2, %c0_i32 : i32, i32, i32
  }
  func.func @transform_2(%arg0: i32, %arg1: i32, %arg2: i32) -> (i32, i32, i32) {
    %c0_i32 = arith.constant 0 : i32
    %c0_i32_0 = arith.constant 0 : i32
    return %arg0, %arg2, %c0_i32 : i32, i32, i32
  }
  func.func @transform_3(%arg0: i32, %arg1: i32, %arg2: i32) -> (i32, i32, i32) {
    %c0_i32 = arith.constant 0 : i32
    return %arg0, %arg1, %arg2 : i32, i32, i32
  }
  func.func @transform_4(%arg0: i32, %arg1: i32, %arg2: i32) -> (i32, i32, i32) {
    %c0_i32 = arith.constant 0 : i32
    %c0_i32_0 = arith.constant 0 : i32
    return %arg0, %arg1, %c0_i32 : i32, i32, i32
  }
}

</mosaic_0001>

<llo_original>
// kernel: tpu_custom_call.1
$region0: #{tpu_custom_call.1}
  #allocation0 [shape = 'u32[]', space=smem, size = 0x4, offset = 0x4, fixed_abs, tag = 'smem constant byte address 0x4 - core index']
  #allocation1 [shape = 'u32[144,128]{1,0:T(1,128)}', space=vmem, size = 0x12000, scoped, tag = 'internal scratch']
  #allocation2 [shape = 'f32[2,8,1]{2,1,0:T(8,128)}', space=vmem, size = 0x2000, scoped, tag = 'scratch operand']
  #allocation3 [shape = 'f32[2,8,1]{2,1,0:T(8,128)}', space=vmem, size = 0x2000, scoped, tag = 'scratch operand']
  #allocation4 [shape = 'f32[2,8,32]{2,1,0:T(8,128)}', space=vmem, size = 0x2000, scoped, tag = 'scratch operand']
  %s0 = inlined_call_operand.vmem [shape: f32[2,8,32], index: 0, kind: input, shape index: {}]
  %s1 = inlined_call_operand.hbm [shape: f32[2,8,32], index: 1, kind: input, shape index: {}]
  %s2 = inlined_call_operand.hbm [shape: f32[2,8,32], index: 2, kind: input, shape index: {}]
  %s3 = inlined_call_operand.vmem [shape: s32[2,8,8], index: 3, kind: input, shape index: {}]
  %s4 = inlined_call_operand.hbm [shape: f32[2,8,32], index: 4, kind: output, shape index: {}]
  %s5 = sld [smem:[#allocation0]]
  $region42: #{tpu_custom_call.1} parent=0
    _
  %s7 = ssub.s32 1, %s5
  %s8 = scalar_select 0, %s7, %s5
  $region1: #{tpu_custom_call.1} parent=0
    #allocation5 [shape = 'u8[8192]{0}', space=vmem, size = 0x2000, scoped, tag = 'input window, operand 1, single buffered']
    #allocation6 [shape = 's32[1]{0}', space=sflag, size = 0x4, scoped, tag = 'scoped memory for tpu_custom_call.1']
    #allocation7 [shape = 's32[1]{0}', space=sflag, size = 0x4, scoped, tag = 'scoped memory for tpu_custom_call.1']
    #allocation8 [shape = 'u8[8192]{0}', space=vmem, size = 0x2000, scoped, tag = 'input window, operand 2, single buffered']
    #allocation9 [shape = 's32[1]{0}', space=sflag, size = 0x4, scoped, tag = 'scoped memory for tpu_custom_call.1']
    #allocation10 [shape = 'u8[8192]{0}', space=vmem, size = 0x2000, scoped, tag = 'output window, operand 0, single buffered']
    %9 = vsyncpa [#allocation6], 0
    %10 = vsyncpa [#allocation9], 0
    %11 = vsyncpa [#allocation7], 0
    // Predicated region
    $region2: #{tpu_custom_call.1} parent=1 // pred_check
      _
    $region3: #{tpu_custom_call.1} parent=1 // pred_check_branch
      %13 = sbr.rel (0) target = $region5
    $region4: #{tpu_custom_call.1} parent=1 // pred_region
      _
    $region5: #{tpu_custom_call.1} parent=1 // pred_fallthru
      _
    // Predicated region
    $region6: #{tpu_custom_call.1} parent=1 // pred_check
      _
    $region7: #{tpu_custom_call.1} parent=1 // pred_check_branch
      %15 = sbr.rel (0) target = $region9
    $region8: #{tpu_custom_call.1} parent=1 // pred_region
      %s17 = ssub.s32 256, 256
      %18 = vsyncadd [#allocation6], %s17
      %s19 = sshll.u32 [#allocation5], 4
      %s20 = int_to_ptr.vmem [resolvable:$true] %s19
      %25 = dma.hbm_to_vmem [thread:$0]  %s1, 256, %s20, [#allocation6], 128, 128, 8
    $region9: #{tpu_custom_call.1} parent=1 // pred_fallthru
      _
    // Predicated region
    $region10: #{tpu_custom_call.1} parent=1 // pred_check
      _
    $region11: #{tpu_custom_call.1} parent=1 // pred_check_branch
      %27 = sbr.rel (0) target = $region13
    $region12: #{tpu_custom_call.1} parent=1 // pred_region
      %s29 = ssub.s32 256, 256
      %30 = vsyncadd [#allocation9], %s29
      %s31 = sshll.u32 [#allocation8], 4
      %s32 = int_to_ptr.vmem [resolvable:$true] %s31
      %37 = dma.hbm_to_vmem [thread:$0]  %s2, 256, %s32, [#allocation9], 128, 128, 8
    $region13: #{tpu_custom_call.1} parent=1 // pred_fallthru
      _
    // Predicated region
    $region14: #{tpu_custom_call.1} parent=1 // pred_check
      _
    $region15: #{tpu_custom_call.1} parent=1 // pred_check_branch
      %39 = sbr.rel (0) target = $region17
    $region16: #{tpu_custom_call.1} parent=1 // pred_region
      _
    $region17: #{tpu_custom_call.1} parent=1 // pred_fallthru
      _
    // Predicated region
    $region18: #{tpu_custom_call.1} parent=1 // pred_check
      _
    $region19: #{tpu_custom_call.1} parent=1 // pred_check_branch
      %41 = sbr.rel (0) target = $region21
    $region20: #{tpu_custom_call.1} parent=1 // pred_region
      %42 = dma.done [#allocation6], 256
    $region21: #{tpu_custom_call.1} parent=1 // pred_fallthru
      _
    // Predicated region
    $region22: #{tpu_custom_call.1} parent=1 // pred_check
      _
    $region23: #{tpu_custom_call.1} parent=1 // pred_check_branch
      %44 = sbr.rel (0) target = $region25
    $region24: #{tpu_custom_call.1} parent=1 // pred_region
      %45 = dma.done [#allocation9], 256
    $region25: #{tpu_custom_call.1} parent=1 // pred_fallthru
      _
    %p46 = scmp.eq.s32.totalorder 0, 0
    // Predicated region
    $region26: #{tpu_custom_call.1} parent=1 // pred_check
      %p47 = pneg %p46
    $region27: #{tpu_custom_call.1} parent=1 // pred_check_branch
      %49 = sbr.rel (%p47) target = $region29
    $region28: #{tpu_custom_call.1} parent=1 // pred_region
      %vm50 = vcmask 7168
      %51 = vst.msk [vmem:[#allocation2] sm:$0xff] %vm50, -1e+30
      %52 = vst.msk [vmem:[#allocation2 + $0x8] sm:$0xff] %vm50, -1e+30
      %53 = vst.msk [vmem:[#allocation3] sm:$0xff] %vm50, 0.0
      %54 = vst.msk [vmem:[#allocation3 + $0x8] sm:$0xff] %vm50, 0.0
      %vm55 = vcmask 261120
      %56 = vst.msk [vmem:[#allocation4] sm:$0xff] %vm55, 0.0
      %57 = vst.msk [vmem:[#allocation4 + $0x8] sm:$0xff] %vm55, 0.0
    $region29: #{tpu_custom_call.1} parent=1 // pred_fallthru
      _
    %v58 = vld [vmem:[%s3] sm:$0xff]
    %v59 = vld [vmem:[%s3 + $0x8] sm:$0xff]
    %vm60 = vcmp.ne.s32.totalorder %v58, 0
    %vm61 = vcmp.ne.s32.totalorder %v59, 0
    %v62 = vld [vmem:[%s0] sm:$0xff]
    %v63 = vld [vmem:[%s0 + $0x8] sm:$0xff]
    %v64 = vmul.f32 %v62, 0.17677669
    %v65 = vmul.f32 %v63, 0.17677669
    %v66 = vld [vmem:[#allocation5] sm:$0xff]
    %v67 = vld [vmem:[#allocation5 + $0x8] sm:$0xff]
    %vm68 = vcmask 261120
    %v70 = vsel %vm68, %v64, 0
    %v73 = vsel %vm68, %v66, 0
    %75 = vmatprep.subr.mxu0 0.0
    %76 = vmatpush1.xpose.msra.mxu0 %v73
    %77 = vmatprep.subr.mxu0 0.0
    %78 = vmatpush1.xpose.msra.mxu0 0.0
    %79 = vmatprep.subr.mxu0 0.0
    %80 = vmatpush1.xpose.msra.mxu0 0.0
    %81 = vmatprep.subr.mxu0 0.0
    %82 = vmatpush1.xpose.msra.mxu0 0.0
    %83 = vmatprep.subr.mxu0 0.0
    %84 = vmatpush1.xpose.msra.mxu0 0.0
    %85 = vmatprep.subr.mxu0 0.0
    %86 = vmatpush1.xpose.msra.mxu0 0.0
    %87 = vmatprep.subr.mxu0 0.0
    %88 = vmatpush1.xpose.msra.mxu0 0.0
    %89 = vmatprep.subr.mxu0 0.0
    %90 = vmatpush1.xpose.msra.mxu0 0.0
    %91 = vmatprep.subr.mxu0 0.0
    %92 = vmatpush1.xpose.msra.mxu0 0.0
    %93 = vmatprep.subr.mxu0 0.0
    %94 = vmatpush1.xpose.msra.mxu0 0.0
    %95 = vmatprep.subr.mxu0 0.0
    %96 = vmatpush1.xpose.msra.mxu0 0.0
    %97 = vmatprep.subr.mxu0 0.0
    %98 = vmatpush1.xpose.msra.mxu0 0.0
    %99 = vmatprep.subr.mxu0 0.0
    %100 = vmatpush1.xpose.msra.mxu0 0.0
    %101 = vmatprep.subr.mxu0 0.0
    %102 = vmatpush1.xpose.msra.mxu0 0.0
    %103 = vmatprep.subr.mxu0 0.0
    %104 = vmatpush1.xpose.msra.mxu0 0.0
    %105 = vmatprep.subr.mxu0 0.0
    %106 = vmatpush1.xpose.msra.mxu0 0.0
    %107 = vmatprep.subr.mxu0 0.0
    %108 = vmatpush1.xpose.msra.mxu0 0.0
    %109 = vmatprep.subr.mxu0 0.0
    %110 = vmatpush1.xpose.msra.mxu0 0.0
    %111 = vmatprep.subr.mxu0 0.0
    %112 = vmatpush1.xpose.msra.mxu0 0.0
    %113 = vmatprep.subr.mxu0 0.0
    %114 = vmatpush1.xpose.msra.mxu0 0.0
    %115 = vmatprep.subr.mxu0 0.0
    %116 = vmatpush1.xpose.msra.mxu0 0.0
    %117 = vmatprep.subr.mxu0 0.0
    %118 = vmatpush1.xpose.msra.mxu0 0.0
    %119 = vmatprep.subr.mxu0 0.0
    %120 = vmatpush1.xpose.msra.mxu0 0.0
    %121 = vmatprep.subr.mxu0 0.0
    %122 = vmatpush1.xpose.msra.mxu0 0.0
    %123 = vmatprep.subr.mxu0 0.0
    %124 = vmatpush1.xpose.msra.mxu0 0.0
    %125 = vmatprep.subr.mxu0 0.0
    %126 = vmatpush1.xpose.msra.mxu0 0.0
    %127 = vmatprep.subr.mxu0 0.0
    %128 = vmatpush1.xpose.msra.mxu0 0.0
    %129 = vmatprep.subr.mxu0 0.0
    %130 = vmatpush1.xpose.msra.mxu0 0.0
    %131 = vmatprep.subr.mxu0 0.0
    %132 = vmatpush1.xpose.msra.mxu0 0.0
    %133 = vmatprep.subr.mxu0 0.0
    %134 = vmatpush1.xpose.msra.mxu0 0.0
    %135 = vmatprep.subr.mxu0 0.0
    %136 = vmatpush1.xpose.msra.mxu0 0.0
    %137 = vmatprep.subr.mxu0 0.0
    %138 = vmatpush1.xpose.msra.mxu0 0.0
    %139 = vmatprep.mubr.f32.mxu0 0.0
    %140 = vmatmul.mubr.f32.gmra.mrb[0].mxu0 %v70
    %v141 = vpop.f32.mrb[0].mxu0
    %v142 = vadd.f32 0.0, %v141
    %v143 = vpop.f32.mrb[0].mxu0
    %144 = vdwg.mxu0
    %v146 = vsel %vm68, %v65, 0
    %v149 = vsel %vm68, %v67, 0
    %151 = vmatprep.subr.mxu0 0.0
    %152 = vmatpush1.xpose.msra.mxu0 %v149
    %153 = vmatprep.subr.mxu0 0.0
    %154 = vmatpush1.xpose.msra.mxu0 0.0
    %155 = vmatprep.subr.mxu0 0.0
    %156 = vmatpush1.xpose.msra.mxu0 0.0
    %157 = vmatprep.subr.mxu0 0.0
    %158 = vmatpush1.xpose.msra.mxu0 0.0
    %159 = vmatprep.subr.mxu0 0.0
    %160 = vmatpush1.xpose.msra.mxu0 0.0
    %161 = vmatprep.subr.mxu0 0.0
    %162 = vmatpush1.xpose.msra.mxu0 0.0
    %163 = vmatprep.subr.mxu0 0.0
    %164 = vmatpush1.xpose.msra.mxu0 0.0
    %165 = vmatprep.subr.mxu0 0.0
    %166 = vmatpush1.xpose.msra.mxu0 0.0
    %167 = vmatprep.subr.mxu0 0.0
    %168 = vmatpush1.xpose.msra.mxu0 0.0
    %169 = vmatprep.subr.mxu0 0.0
    %170 = vmatpush1.xpose.msra.mxu0 0.0
    %171 = vmatprep.subr.mxu0 0.0
    %172 = vmatpush1.xpose.msra.mxu0 0.0
    %173 = vmatprep.subr.mxu0 0.0
    %174 = vmatpush1.xpose.msra.mxu0 0.0
    %175 = vmatprep.subr.mxu0 0.0
    %176 = vmatpush1.xpose.msra.mxu0 0.0
    %177 = vmatprep.subr.mxu0 0.0
    %178 = vmatpush1.xpose.msra.mxu0 0.0
    %179 = vmatprep.subr.mxu0 0.0
    %180 = vmatpush1.xpose.msra.mxu0 0.0
    %181 = vmatprep.subr.mxu0 0.0
    %182 = vmatpush1.xpose.msra.mxu0 0.0
    %183 = vmatprep.subr.mxu0 0.0
    %184 = vmatpush1.xpose.msra.mxu0 0.0
    %185 = vmatprep.subr.mxu0 0.0
    %186 = vmatpush1.xpose.msra.mxu0 0.0
    %187 = vmatprep.subr.mxu0 0.0
    %188 = vmatpush1.xpose.msra.mxu0 0.0
    %189 = vmatprep.subr.mxu0 0.0
    %190 = vmatpush1.xpose.msra.mxu0 0.0
    %191 = vmatprep.subr.mxu0 0.0
    %192 = vmatpush1.xpose.msra.mxu0 0.0
    %193 = vmatprep.subr.mxu0 0.0
    %194 = vmatpush1.xpose.msra.mxu0 0.0
    %195 = vmatprep.subr.mxu0 0.0
    %196 = vmatpush1.xpose.msra.mxu0 0.0
    %197 = vmatprep.subr.mxu0 0.0
    %198 = vmatpush1.xpose.msra.mxu0 0.0
    %199 = vmatprep.subr.mxu0 0.0
    %200 = vmatpush1.xpose.msra.mxu0 0.0
    %201 = vmatprep.subr.mxu0 0.0
    %202 = vmatpush1.xpose.msra.mxu0 0.0
    %203 = vmatprep.subr.mxu0 0.0
    %204 = vmatpush1.xpose.msra.mxu0 0.0
    %205 = vmatprep.subr.mxu0 0.0
    %206 = vmatpush1.xpose.msra.mxu0 0.0
    %207 = vmatprep.subr.mxu0 0.0
    %208 = vmatpush1.xpose.msra.mxu0 0.0
    %209 = vmatprep.subr.mxu0 0.0
    %210 = vmatpush1.xpose.msra.mxu0 0.0
    %211 = vmatprep.subr.mxu0 0.0
    %212 = vmatpush1.xpose.msra.mxu0 0.0
    %213 = vmatprep.subr.mxu0 0.0
    %214 = vmatpush1.xpose.msra.mxu0 0.0
    %215 = vmatprep.mubr.f32.mxu0 0.0
    %216 = vmatmul.mubr.f32.gmra.mrb[0].mxu0 %v146
    %v217 = vpop.f32.mrb[0].mxu0
    %v218 = vadd.f32 0.0, %v217
    %v219 = vpop.f32.mrb[0].mxu0
    %220 = vdwg.mxu0
    %v221 = vsel %vm60, -1e+30, %v142
    %v222 = vsel %vm61, -1e+30, %v218
    %v223 = vld [vmem:[#allocation2] sm:$0xff]
    %v224 = vld [vmem:[#allocation2 + $0x8] sm:$0xff]
    %vm225 = vcmask 64512
    %v226 = vsel %vm225, %v221, -inf
    %227 = vmax.xlane.f32.xlu0 %v226
    %v228 = vpop.xlane.xlu0 %227
    %v229 = vsel %vm225, %v222, -inf
    %230 = vmax.xlane.f32.xlu0 %v229
    %v231 = vpop.xlane.xlu0 %230
    %v232 = vmax.f32 %v223, %v228
    %v233 = vmax.f32 %v224, %v231
    %v234 = vsub.f32 %v223, %v232
    %v235 = vsub.f32 %v224, %v233
    %v236 = vmul.f32 %v234, 1.442695
    %v237 = vpow.pop %v236
    %v238 = vmul.f32 %v235, 1.442695
    %v239 = vpow.pop %v238
    %241 = vset.pattern.permute.xlu0 0
    %242 = vperm.xlu0 %241, %v232
    %v243 = vpop.permute.xlu0 %242
    %246 = vset.pattern.permute.xlu0 0
    %247 = vperm.xlu0 %246, %v233
    %v248 = vpop.permute.xlu0 %247
    %v250 = vsub.f32 %v221, %v243
    %v251 = vsub.f32 %v222, %v248
    %v252 = vmul.f32 %v250, 1.442695
    %v253 = vpow.pop %v252
    %v254 = vmul.f32 %v251, 1.442695
    %v255 = vpow.pop %v254
    %v256 = vld [vmem:[#allocation3] sm:$0xff]
    %v257 = vld [vmem:[#allocation3 + $0x8] sm:$0xff]
    %v258 = vmul.f32 %v237, %v256
    %v259 = vmul.f32 %v239, %v257
    %v260 = vsel %vm225, %v253, 0.0
    %261 = vadd.xlane.f32.xlu0 %v260
    %v262 = vpop.xlane.xlu0 %261
    %v263 = vsel %vm225, %v255, 0.0
    %264 = vadd.xlane.f32.xlu0 %v263
    %v265 = vpop.xlane.xlu0 %264
    %v266 = vadd.f32 %v258, %v262
    %v267 = vadd.f32 %v259, %v265
    %vm268 = vcmask 7168
    %269 = vst.msk [vmem:[#allocation3] sm:$0xff] %vm268, %v266
    %270 = vst.msk [vmem:[#allocation3 + $0x8] sm:$0xff] %vm268, %v267
    %v271 = vld [vmem:[#allocation4] sm:$0xff]
    %v272 = vld [vmem:[#allocation4 + $0x8] sm:$0xff]
    %274 = vset.pattern.permute.xlu0 0
    %275 = vperm.xlu0 %274, %v237
    %v276 = vpop.permute.xlu0 %275
    %279 = vset.pattern.permute.xlu0 0
    %280 = vperm.xlu0 %279, %v239
    %v281 = vpop.permute.xlu0 %280
    %v283 = vmul.f32 %v276, %v271
    %v284 = vmul.f32 %v281, %v272
    %v285 = vld [vmem:[#allocation8] sm:$0xff]
    %v286 = vld [vmem:[#allocation8 + $0x8] sm:$0xff]
    %v288 = vsel %vm225, %v253, 0
    %290 = vmatprep.subr.mxu0 0.0
    %291 = vmatpush1.msra.mxu0 %v285
    %292 = vmatprep.subr.mxu0 0.0
    %293 = vmatpush1.msra.mxu0 0.0
    %294 = vmatprep.subr.mxu0 0.0
    %295 = vmatpush1.msra.mxu0 0.0
    %296 = vmatprep.subr.mxu0 0.0
    %297 = vmatpush1.msra.mxu0 0.0
    %298 = vmatprep.subr.mxu0 0.0
    %299 = vmatpush1.msra.mxu0 0.0
    %300 = vmatprep.subr.mxu0 0.0
    %301 = vmatpush1.msra.mxu0 0.0
    %302 = vmatprep.subr.mxu0 0.0
    %303 = vmatpush1.msra.mxu0 0.0
    %304 = vmatprep.subr.mxu0 0.0
    %305 = vmatpush1.msra.mxu0 0.0
    %306 = vmatprep.subr.mxu0 0.0
    %307 = vmatpush1.msra.mxu0 0.0
    %308 = vmatprep.subr.mxu0 0.0
    %309 = vmatpush1.msra.mxu0 0.0
    %310 = vmatprep.subr.mxu0 0.0
    %311 = vmatpush1.msra.mxu0 0.0
    %312 = vmatprep.subr.mxu0 0.0
    %313 = vmatpush1.msra.mxu0 0.0
    %314 = vmatprep.subr.mxu0 0.0
    %315 = vmatpush1.msra.mxu0 0.0
    %316 = vmatprep.subr.mxu0 0.0
    %317 = vmatpush1.msra.mxu0 0.0
    %318 = vmatprep.subr.mxu0 0.0
    %319 = vmatpush1.msra.mxu0 0.0
    %320 = vmatprep.subr.mxu0 0.0
    %321 = vmatpush1.msra.mxu0 0.0
    %322 = vmatprep.subr.mxu0 0.0
    %323 = vmatpush1.msra.mxu0 0.0
    %324 = vmatprep.subr.mxu0 0.0
    %325 = vmatpush1.msra.mxu0 0.0
    %326 = vmatprep.subr.mxu0 0.0
    %327 = vmatpush1.msra.mxu0 0.0
    %328 = vmatprep.subr.mxu0 0.0
    %329 = vmatpush1.msra.mxu0 0.0
    %330 = vmatprep.subr.mxu0 0.0
    %331 = vmatpush1.msra.mxu0 0.0
    %332 = vmatprep.subr.mxu0 0.0
    %333 = vmatpush1.msra.mxu0 0.0
    %334 = vmatprep.subr.mxu0 0.0
    %335 = vmatpush1.msra.mxu0 0.0
    %336 = vmatprep.subr.mxu0 0.0
    %337 = vmatpush1.msra.mxu0 0.0
    %338 = vmatprep.subr.mxu0 0.0
    %339 = vmatpush1.msra.mxu0 0.0
    %340 = vmatprep.subr.mxu0 0.0
    %341 = vmatpush1.msra.mxu0 0.0
    %342 = vmatprep.subr.mxu0 0.0
    %343 = vmatpush1.msra.mxu0 0.0
    %344 = vmatprep.subr.mxu0 0.0
    %345 = vmatpush1.msra.mxu0 0.0
    %346 = vmatprep.subr.mxu0 0.0
    %347 = vmatpush1.msra.mxu0 0.0
    %348 = vmatprep.subr.mxu0 0.0
    %349 = vmatpush1.msra.mxu0 0.0
    %350 = vmatprep.subr.mxu0 0.0
    %351 = vmatpush1.msra.mxu0 0.0
    %352 = vmatprep.subr.mxu0 0.0
    %353 = vmatpush1.msra.mxu0 0.0
    %354 = vmatprep.mubr.f32.mxu0 0.0
    %355 = vmatmul.mubr.f32.gmra.mrb[0].mxu0 %v288
    %v356 = vpop.f32.mrb[0].mxu0
    %v357 = vadd.f32 0.0, %v356
    %v358 = vpop.f32.mrb[0].mxu0
    %359 = vdwg.mxu0
    %v361 = vsel %vm225, %v255, 0
    %363 = vmatprep.subr.mxu0 0.0
    %364 = vmatpush1.msra.mxu0 %v286
    %365 = vmatprep.subr.mxu0 0.0
    %366 = vmatpush1.msra.mxu0 0.0
    %367 = vmatprep.subr.mxu0 0.0
    %368 = vmatpush1.msra.mxu0 0.0
    %369 = vmatprep.subr.mxu0 0.0
    %370 = vmatpush1.msra.mxu0 0.0
    %371 = vmatprep.subr.mxu0 0.0
    %372 = vmatpush1.msra.mxu0 0.0
    %373 = vmatprep.subr.mxu0 0.0
    %374 = vmatpush1.msra.mxu0 0.0
    %375 = vmatprep.subr.mxu0 0.0
    %376 = vmatpush1.msra.mxu0 0.0
    %377 = vmatprep.subr.mxu0 0.0
    %378 = vmatpush1.msra.mxu0 0.0
    %379 = vmatprep.subr.mxu0 0.0
    %380 = vmatpush1.msra.mxu0 0.0
    %381 = vmatprep.subr.mxu0 0.0
    %382 = vmatpush1.msra.mxu0 0.0
    %383 = vmatprep.subr.mxu0 0.0
    %384 = vmatpush1.msra.mxu0 0.0
    %385 = vmatprep.subr.mxu0 0.0
    %386 = vmatpush1.msra.mxu0 0.0
    %387 = vmatprep.subr.mxu0 0.0
    %388 = vmatpush1.msra.mxu0 0.0
    %389 = vmatprep.subr.mxu0 0.0
    %390 = vmatpush1.msra.mxu0 0.0
    %391 = vmatprep.subr.mxu0 0.0
    %392 = vmatpush1.msra.mxu0 0.0
    %393 = vmatprep.subr.mxu0 0.0
    %394 = vmatpush1.msra.mxu0 0.0
    %395 = vmatprep.subr.mxu0 0.0
    %396 = vmatpush1.msra.mxu0 0.0
    %397 = vmatprep.subr.mxu0 0.0
    %398 = vmatpush1.msra.mxu0 0.0
    %399 = vmatprep.subr.mxu0 0.0
    %400 = vmatpush1.msra.mxu0 0.0
    %401 = vmatprep.subr.mxu0 0.0
    %402 = vmatpush1.msra.mxu0 0.0
    %403 = vmatprep.subr.mxu0 0.0
    %404 = vmatpush1.msra.mxu0 0.0
    %405 = vmatprep.subr.mxu0 0.0
    %406 = vmatpush1.msra.mxu0 0.0
    %407 = vmatprep.subr.mxu0 0.0
    %408 = vmatpush1.msra.mxu0 0.0
    %409 = vmatprep.subr.mxu0 0.0
    %410 = vmatpush1.msra.mxu0 0.0
    %411 = vmatprep.subr.mxu0 0.0
    %412 = vmatpush1.msra.mxu0 0.0
    %413 = vmatprep.subr.mxu0 0.0
    %414 = vmatpush1.msra.mxu0 0.0
    %415 = vmatprep.subr.mxu0 0.0
    %416 = vmatpush1.msra.mxu0 0.0
    %417 = vmatprep.subr.mxu0 0.0
    %418 = vmatpush1.msra.mxu0 0.0
    %419 = vmatprep.subr.mxu0 0.0
    %420 = vmatpush1.msra.mxu0 0.0
    %421 = vmatprep.subr.mxu0 0.0
    %422 = vmatpush1.msra.mxu0 0.0
    %423 = vmatprep.subr.mxu0 0.0
    %424 = vmatpush1.msra.mxu0 0.0
    %425 = vmatprep.subr.mxu0 0.0
    %426 = vmatpush1.msra.mxu0 0.0
    %427 = vmatprep.mubr.f32.mxu0 0.0
    %428 = vmatmul.mubr.f32.gmra.mrb[0].mxu0 %v361
    %v429 = vpop.f32.mrb[0].mxu0
    %v430 = vadd.f32 0.0, %v429
    %v431 = vpop.f32.mrb[0].mxu0
    %432 = vdwg.mxu0
    %v433 = vadd.f32 %v283, %v357
    %v434 = vadd.f32 %v284, %v430
    %435 = vst.msk [vmem:[#allocation4] sm:$0xff] %vm68, %v433
    %436 = vst.msk [vmem:[#allocation4 + $0x8] sm:$0xff] %vm68, %v434
    %437 = vst.msk [vmem:[#allocation2] sm:$0xff] %vm268, %v232
    %438 = vst.msk [vmem:[#allocation2 + $0x8] sm:$0xff] %vm268, %v233
    // Predicated region
    $region30: #{tpu_custom_call.1} parent=1 // pred_check
      %p439 = pneg %p46
    $region31: #{tpu_custom_call.1} parent=1 // pred_check_branch
      %441 = sbr.rel (%p439) target = $region33
    $region32: #{tpu_custom_call.1} parent=1 // pred_region
      %v442 = vld [vmem:[#allocation3] sm:$0xff]
      %v443 = vld [vmem:[#allocation3 + $0x8] sm:$0xff]
      %v444 = vrcp.pop %v442
      %v445 = vrcp.pop %v443
      %v446 = vld [vmem:[#allocation4] sm:$0xff]
      %v447 = vld [vmem:[#allocation4 + $0x8] sm:$0xff]
      %449 = vset.pattern.permute.xlu0 0
      %450 = vperm.xlu0 %449, %v444
      %v451 = vpop.permute.xlu0 %450
      %454 = vset.pattern.permute.xlu0 0
      %455 = vperm.xlu0 %454, %v445
      %v456 = vpop.permute.xlu0 %455
      %v458 = vmul.f32 %v446, %v451
      %v459 = vmul.f32 %v447, %v456
      %460 = vst.msk [vmem:[#allocation10] sm:$0xff] %vm68, %v458
      %461 = vst.msk [vmem:[#allocation10 + $0x8] sm:$0xff] %vm68, %v459
    $region33: #{tpu_custom_call.1} parent=1 // pred_fallthru
      _
    // Predicated region
    $region34: #{tpu_custom_call.1} parent=1 // pred_check
      _
    $region35: #{tpu_custom_call.1} parent=1 // pred_check_branch
      %463 = sbr.rel (0) target = $region37
    $region36: #{tpu_custom_call.1} parent=1 // pred_region
      %s465 = ssub.s32 256, 256
      %466 = vsyncadd [#allocation7], %s465
      %s467 = sshll.u32 [#allocation10], 4
      %s468 = int_to_ptr.vmem [resolvable:$true] %s467
      %473 = dma.vmem_to_hbm [thread:$0]  %s468, 256, %s4, [#allocation7], 128, 128, 8
    $region37: #{tpu_custom_call.1} parent=1 // pred_fallthru
      _
    // Predicated region
    $region38: #{tpu_custom_call.1} parent=1 // pred_check
      _
    $region39: #{tpu_custom_call.1} parent=1 // pred_check_branch
      %475 = sbr.rel (0) target = $region41
    $region40: #{tpu_custom_call.1} parent=1 // pred_region
      %476 = dma.done [#allocation7], 256
    $region41: #{tpu_custom_call.1} parent=1 // pred_fallthru
      _
    %477 = vsyncpa [#allocation6], 1
    %478 = vsyncpa [#allocation9], 1
    %479 = vsyncpa [#allocation7], 1

</llo_original>
